<compile_context>
chip_gen: v7x
topology: tpu7x:2x2x1
jax: 0.10.0
libtpu: 0.0.40
codegen_flags: <defaults>
</compile_context>

<pallas_src>
import math
import functools

import jax
import jax.numpy as jnp
from jax.experimental import pallas as pl
from jax.experimental.pallas import tpu as pltpu

_INV_SQRT2 = 1.0 / math.sqrt(2.0)
_GELU_TANH_C = math.sqrt(2.0 / math.pi)


def _round_up(x, m):
    return ((x + m - 1) // m) * m


def _vmem_capacity_bytes():
    try:
        return int(pltpu.get_tpu_info().vmem_capacity_bytes)
    except Exception:
        return 64 * 1024 * 1024  # conservative: v7x has 64 MiB per TensorCore


def _weight_chunk_spec(shape, index_map, depth):
    """BlockSpec with deeper pipelining if the running JAX supports it."""
    try:
        return pl.BlockSpec(shape, index_map, pipeline_mode=pl.Buffered(depth))
    except Exception:
        return pl.BlockSpec(shape, index_map)


def _layernorm_f32(x, gamma, beta, d_real, d_pad, eps):
    """LayerNorm over the (possibly zero-padded) last dim; stats over d_real."""
    inv_d = 1.0 / float(d_real)
    mean = jnp.sum(x, axis=-1, keepdims=True) * inv_d
    centered = x - mean
    if d_pad != d_real:
        lane = jax.lax.broadcasted_iota(jnp.int32, x.shape, x.ndim - 1)
        centered = jnp.where(lane < d_real, centered, 0.0)
    var = jnp.sum(centered * centered, axis=-1, keepdims=True) * inv_d
    h = centered * jax.lax.rsqrt(var + eps)
    # Padded lanes: gamma/beta are zero there -> h is exactly 0.
    return h * gamma + beta


def _gelu_f32(h, approximate):
    if approximate:
        # tanh form -> EUP transcendental slot (near-free once MXU-bound).
        return 0.5 * h * (1.0 + jnp.tanh(_GELU_TANH_C * (h + 0.044715 * h * h * h)))
    return 0.5 * h * (1.0 + jax.lax.erf(h * _INV_SQRT2))


# ----------------------------------------------------------------------------
# Resident-weights kernel: 1-D grid over row tiles; W1/b1/W2 live in VMEM.
# ----------------------------------------------------------------------------
def _ffn_resident_kernel(x_ref, gamma_ref, beta_ref, w1_ref, b1_ref, w2_ref,
                         o_ref, *, eps, d_real, d_pad, approx_gelu):
    x = x_ref[...].astype(jnp.float32)
    h = _layernorm_f32(x, gamma_ref[...].astype(jnp.float32),
                       beta_ref[...].astype(jnp.float32), d_real, d_pad, eps)
    h1 = jnp.dot(h.astype(w1_ref.dtype), w1_ref[...],
                 preferred_element_type=jnp.float32)
    h1 = h1 + b1_ref[...].astype(jnp.float32)
    h1 = _gelu_f32(h1, approx_gelu)
    y = jnp.dot(h1.astype(w2_ref.dtype), w2_ref[...],
                preferred_element_type=jnp.float32)
    o_ref[...] = (x + y).astype(o_ref.dtype)


# ----------------------------------------------------------------------------
# Streaming kernel: 2-D grid (row tiles, inner-dim chunks); f32 accumulator.
# ----------------------------------------------------------------------------
def _ffn_streaming_kernel(x_ref, gamma_ref, beta_ref, w1_ref, b1_ref, w2_ref,
                          o_ref, h_ref, acc_ref, *, eps, d_real, d_pad,
                          approx_gelu):
    k = pl.program_id(1)

    @pl.when(k == 0)
    def _():
        x = x_ref[...].astype(jnp.float32)
        h = _layernorm_f32(x, gamma_ref[...].astype(jnp.float32),
                           beta_ref[...].astype(jnp.float32), d_real, d_pad, eps)
        h_ref[...] = h.astype(h_ref.dtype)
        acc_ref[...] = jnp.zeros_like(acc_ref)

    h1 = jnp.dot(h_ref[...], w1_ref[...], preferred_element_type=jnp.float32)
    h1 = h1 + b1_ref[...].astype(jnp.float32)
    h1 = _gelu_f32(h1, approx_gelu)
    acc_ref[...] += jnp.dot(h1.astype(w2_ref.dtype), w2_ref[...],
                            preferred_element_type=jnp.float32)

    @pl.when(k == pl.num_programs(1) - 1)
    def _():
        o_ref[...] = (x_ref[...].astype(jnp.float32) + acc_ref[...]).astype(o_ref.dtype)


# ----------------------------------------------------------------------------
# Wrapper
# ----------------------------------------------------------------------------
def positionwise_ffn(hidden, gamma, beta, w1, b1, w2, *, eps=1e-5,
                     tm=None, tc=512, approximate_gelu=False):
    """hidden: (B, S, D). Params follow torch shapes:
    gamma/beta (D,), ffn[0].weight (4D, D) passed transposed as w1 (D, 4D),
    ffn[0].bias (4D,), ffn[3].weight (D, 4D) passed transposed as w2 (4D, D)."""
    B, S, D = hidden.shape
    D_inner = w1.shape[1]
    R = B * S
    x2d = hidden.reshape(R, D)

    x_bytes = jnp.dtype(hidden.dtype).itemsize
    w_bytes = jnp.dtype(w1.dtype).itemsize
    vmem_cap = _vmem_capacity_bytes()

    # ---- Lane padding: d_model -> multiple of 128 (dense vld / unmasked vst).
    d_pad = _round_up(D, 128)
    if d_pad != D:
        x2d = jnp.pad(x2d, ((0, 0), (0, d_pad - D)))
        gamma = jnp.pad(gamma, (0, d_pad - D))
        beta = jnp.pad(beta, (0, d_pad - D))
        w1 = jnp.pad(w1, ((0, d_pad - D), (0, 0)))
        w2 = jnp.pad(w2, ((0, 0), (0, d_pad - D)))

    # ---- Inner dim: pad to multiple of 128 (exact: zero cols/rows/bias).
    din_pad = _round_up(D_inner, 128)
    if din_pad != D_inner:
        w1 = jnp.pad(w1, ((0, 0), (0, din_pad - D_inner)))
        b1 = jnp.pad(b1, (0, din_pad - D_inner))
        w2 = jnp.pad(w2, ((0, din_pad - D_inner), (0, 0)))

    gamma2d = gamma.reshape(1, d_pad)
    beta2d = beta.reshape(1, d_pad)
    b1_2d = b1.reshape(1, din_pad)

    # ---- Residency decision: does W1 + W2 (conservatively double-buffered)
    #      plus the per-tile activations / (TM, 4D) GELU intermediate fit VMEM?
    tm_res = 256 if tm is None else tm
    tm_res = max(8, min(_round_up(tm_res, 8), _round_up(R, 8)))
    weight_bytes = 2 * ((d_pad * din_pad + din_pad * d_pad + din_pad) * w_bytes)
    act_bytes = tm_res * d_pad * (4 * x_bytes + 3 * 4)      # 2x in + 2x out + f32 temps
    inter_bytes = int(1.5 * tm_res * din_pad * 4)            # (TM, 4D) f32 GELU temp
    est_resident = weight_bytes + act_bytes + inter_bytes + (2 << 20)
    use_resident = est_resident <= int(0.85 * vmem_cap)

    if use_resident:
        tm_eff = tm_res
        r_pad = _round_up(R, tm_eff)
        if r_pad != R:
            x2d = jnp.pad(x2d, ((0, r_pad - R), (0, 0)))

        grid = (r_pad // tm_eff,)
        in_specs = [
            pl.BlockSpec((tm_eff, d_pad), lambda i: (i, 0)),     # x rows
            pl.BlockSpec((1, d_pad), lambda i: (0, 0)),          # gamma (resident)
            pl.BlockSpec((1, d_pad), lambda i: (0, 0)),          # beta  (resident)
            pl.BlockSpec((d_pad, din_pad), lambda i: (0, 0)),    # W1    (resident)
            pl.BlockSpec((1, din_pad), lambda i: (0, 0)),        # b1    (resident)
            pl.BlockSpec((din_pad, d_pad), lambda i: (0, 0)),    # W2    (resident)
        ]
        out_specs = pl.BlockSpec((tm_eff, d_pad), lambda i: (i, 0))
        scratch_shapes = []
        dim_sem = ("parallel",)
        kernel = functools.partial(_ffn_resident_kernel, eps=eps, d_real=D,
                                   d_pad=d_pad, approx_gelu=approximate_gelu)
        est_bytes = est_resident
    else:
        # ---- Streaming path: big row tiles so weight-stream intensity crosses
        #      the HBM ridge; chunk the 4D dim with a 128-aligned divisor.
        tc_req = max(128, (int(tc) // 128) * 128)
        tc_eff = 128
        c = min(tc_req, din_pad)
        while c >= 128:
            if din_pad % c == 0:
                tc_eff = c
                break
            c -= 128

        tm_cap = 512 if vmem_cap <= (80 << 20) else 1024      # v7x vs v5e/v6e
        tm_stream = tm_cap if tm is None else tm
        tm_stream = max(8, min(_round_up(tm_stream, 8), _round_up(R, 8)))
        # Clamp to VMEM budget (3-deep weight chunks + per-row activation cost).
        chunk_w_bytes = 3 * (d_pad * tc_eff + tc_eff * d_pad) * w_bytes
        per_row = d_pad * (4 * x_bytes + w_bytes + 4) + 2 * tc_eff * 4
        budget = int(0.75 * vmem_cap) - chunk_w_bytes - (2 << 20)
        tm_max = max(8, (budget // max(per_row, 1)) // 8 * 8)
        tm_eff = max(8, min(tm_stream, tm_max))

        r_pad = _round_up(R, tm_eff)
        if r_pad != R:
            x2d = jnp.pad(x2d, ((0, r_pad - R), (0, 0)))

        grid = (r_pad // tm_eff, din_pad // tc_eff)
        in_specs = [
            pl.BlockSpec((tm_eff, d_pad), lambda i, k: (i, 0)),              # x rows
            pl.BlockSpec((1, d_pad), lambda i, k: (0, 0)),                   # gamma
            pl.BlockSpec((1, d_pad), lambda i, k: (0, 0)),                   # beta
            _weight_chunk_spec((d_pad, tc_eff), lambda i, k: (0, k), 3),     # W1 chunk
            pl.BlockSpec((1, tc_eff), lambda i, k: (0, k)),                  # b1 chunk
            _weight_chunk_spec((tc_eff, d_pad), lambda i, k: (k, 0), 3),     # W2 chunk
        ]
        out_specs = pl.BlockSpec((tm_eff, d_pad), lambda i, k: (i, 0))
        scratch_shapes = [
            pltpu.VMEM((tm_eff, d_pad), w1.dtype),      # normalized activations
            pltpu.VMEM((tm_eff, d_pad), jnp.float32),   # f32 accumulator
        ]
        dim_sem = ("parallel", "arbitrary")
        kernel = functools.partial(_ffn_streaming_kernel, eps=eps, d_real=D,
                                   d_pad=d_pad, approx_gelu=approximate_gelu)
        est_bytes = (chunk_w_bytes + tm_eff * per_row
                     + tm_eff * tc_eff * 4 * 2 + (2 << 20))

    vmem_limit = int(min(0.9 * vmem_cap, max(est_bytes * 1.3, 32 << 20)))

    out = pl.pallas_call(
        kernel,
        out_shape=jax.ShapeDtypeStruct((r_pad, d_pad), hidden.dtype),
        grid=grid,
        in_specs=in_specs,
        out_specs=out_specs,
        scratch_shapes=scratch_shapes,
        compiler_params=pltpu.CompilerParams(
            dimension_semantics=dim_sem,
            vmem_limit_bytes=vmem_limit,
        ),
    )(x2d, gamma2d, beta2d, w1, b1_2d, w2)

    return out[:R, :D].reshape(B, S, D)


# ----------------------------------------------------------------------------
# Pure-JAX reference (matches torch: LayerNorm -> Linear+bias -> exact GELU ->
# Linear(no bias) -> residual; dropout identity in eval).
# ----------------------------------------------------------------------------
def _reference(hidden, gamma, beta, w1, b1, w2, eps):
    x = hidden.astype(jnp.float32)
    mean = jnp.mean(x, axis=-1, keepdims=True)
    var = jnp.mean((x - mean) ** 2, axis=-1, keepdims=True)
    h = (x - mean) / jnp.sqrt(var + eps) * gamma + beta
    h = h @ w1 + b1
    h = 0.5 * h * (1.0 + jax.lax.erf(h / math.sqrt(2.0)))
    h = h @ w2
    return (x + h).astype(hidden.dtype)


if __name__ == "__main__":
    # Small, module-consistent shapes: batch=2, seq=8, d_model=32, d_inner=4*32
    B, S, D = 2, 8, 32
    D_inner = 4 * D
    eps = 1e-5

    key = jax.random.PRNGKey(0)
    k_x, k_g, k_b, k_w1, k_b1, k_w2 = jax.random.split(key, 6)

    hidden = jax.random.normal(k_x, (B, S, D), dtype=jnp.float32)
    gamma = jnp.ones((D,), jnp.float32) + 0.01 * jax.random.normal(k_g, (D,), jnp.float32)
    beta = 0.01 * jax.random.normal(k_b, (D,), jnp.float32)
    w1 = jax.random.normal(k_w1, (D, D_inner), jnp.float32) * (1.0 / math.sqrt(D))
    b1 = jax.random.normal(k_b1, (D_inner,), jnp.float32) * 0.01
    w2 = jax.random.normal(k_w2, (D_inner, D), jnp.float32) * (1.0 / math.sqrt(D_inner))

    out = positionwise_ffn(hidden, gamma, beta, w1, b1, w2, eps=eps)
    out = jax.block_until_ready(out)

    ref = _reference(hidden, gamma, beta, w1, b1, w2, eps)
    assert out.shape == hidden.shape
    assert jnp.allclose(out, ref, atol=1e-4, rtol=1e-4), "mismatch vs reference"

    print("KERNEL_OK")
</pallas_src>

<mosaic_0001>
module attributes {stable_mosaic.version = 11 : i64} {
  func.func @_ffn_resident_kernel(%arg0: i32, %arg1: memref<16x128xf32, #tpu.memory_space<vmem>>, %arg2: memref<1x128xf32, #tpu.memory_space<vmem>>, %arg3: memref<1x128xf32, #tpu.memory_space<vmem>>, %arg4: memref<128x128xf32, #tpu.memory_space<vmem>>, %arg5: memref<1x128xf32, #tpu.memory_space<vmem>>, %arg6: memref<128x128xf32, #tpu.memory_space<vmem>>, %arg7: memref<16x128xf32, #tpu.memory_space<vmem>>) attributes {dimension_semantics = [#tpu.dimension_semantics<parallel>], iteration_bounds = array<i64: 1>, scalar_prefetch = 0 : i64, scratch_operands = 0 : i64, tpu.core_type = #tpu.core_type<tc>, window_params = [{transform_indices = @transform_0, window_bounds = array<i64: 16, 128>}, {pipeline_mode = #tpu.pipeline_mode<synchronous>, transform_indices = @transform_1, window_bounds = array<i64: 1, 128>}, {pipeline_mode = #tpu.pipeline_mode<synchronous>, transform_indices = @transform_2, window_bounds = array<i64: 1, 128>}, {pipeline_mode = #tpu.pipeline_mode<synchronous>, transform_indices = @transform_3, window_bounds = array<i64: 128, 128>}, {pipeline_mode = #tpu.pipeline_mode<synchronous>, transform_indices = @transform_4, window_bounds = array<i64: 1, 128>}, {pipeline_mode = #tpu.pipeline_mode<synchronous>, transform_indices = @transform_5, window_bounds = array<i64: 128, 128>}, {transform_indices = @transform_6, window_bounds = array<i64: 16, 128>}]} {
    %c0 = arith.constant 0 : index
    %c0_0 = arith.constant 0 : index
    %0 = vector.load %arg1[%c0, %c0_0] : memref<16x128xf32, #tpu.memory_space<vmem>>, vector<16x128xf32>
    %c0_1 = arith.constant 0 : index
    %c0_2 = arith.constant 0 : index
    %1 = vector.load %arg2[%c0_1, %c0_2] : memref<1x128xf32, #tpu.memory_space<vmem>>, vector<1x128xf32>
    %c0_3 = arith.constant 0 : index
    %c0_4 = arith.constant 0 : index
    %2 = vector.load %arg3[%c0_3, %c0_4] : memref<1x128xf32, #tpu.memory_space<vmem>>, vector<1x128xf32>
    %cst = arith.constant dense<0.000000e+00> : vector<16xf32>
    %3 = vector.multi_reduction <add>, %0, %cst [1] : vector<16x128xf32> to vector<16xf32>
    %4 = vector.shape_cast %3 : vector<16xf32> to vector<16x1xf32>
    %cst_5 = arith.constant 3.125000e-02 : f32
    %5 = vector.broadcast %cst_5 : f32 to vector<16x1xf32>
    %6 = arith.mulf %4, %5 : vector<16x1xf32>
    %7 = vector.broadcast %6 : vector<16x1xf32> to vector<16x128xf32>
    %8 = arith.subf %0, %7 : vector<16x128xf32>
    %9 = tpu.iota {dimensions = array<i32: 1>} : vector<16x128xi32>
    %c32_i32 = arith.constant 32 : i32
    %10 = vector.broadcast %c32_i32 : i32 to vector<16x128xi32>
    %11 = arith.cmpi slt, %9, %10 : vector<16x128xi32>
    %cst_6 = arith.constant 0.000000e+00 : f32
    %12 = vector.broadcast %cst_6 : f32 to vector<16x128xf32>
    %13 = arith.select %11, %8, %12 : vector<16x128xi1>, vector<16x128xf32>
    %14 = arith.mulf %13, %13 : vector<16x128xf32>
    %cst_7 = arith.constant dense<0.000000e+00> : vector<16xf32>
    %15 = vector.multi_reduction <add>, %14, %cst_7 [1] : vector<16x128xf32> to vector<16xf32>
    %16 = vector.shape_cast %15 : vector<16xf32> to vector<16x1xf32>
    %cst_8 = arith.constant 3.125000e-02 : f32
    %17 = vector.broadcast %cst_8 : f32 to vector<16x1xf32>
    %18 = arith.mulf %16, %17 : vector<16x1xf32>
    %cst_9 = arith.constant 9.99999974E-6 : f32
    %19 = vector.broadcast %cst_9 : f32 to vector<16x1xf32>
    %20 = arith.addf %18, %19 : vector<16x1xf32>
    %21 = math.rsqrt %20 : vector<16x1xf32>
    %22 = vector.broadcast %21 : vector<16x1xf32> to vector<16x128xf32>
    %23 = arith.mulf %13, %22 : vector<16x128xf32>
    %24 = vector.broadcast %1 : vector<1x128xf32> to vector<16x128xf32>
    %25 = arith.mulf %23, %24 : vector<16x128xf32>
    %26 = vector.broadcast %2 : vector<1x128xf32> to vector<16x128xf32>
    %27 = arith.addf %25, %26 : vector<16x128xf32>
    %c0_10 = arith.constant 0 : index
    %c0_11 = arith.constant 0 : index
    %28 = vector.load %arg4[%c0_10, %c0_11] : memref<128x128xf32, #tpu.memory_space<vmem>>, vector<128x128xf32>
    %cst_12 = arith.constant dense<0.000000e+00> : vector<16x128xf32>
    %29 = tpu.matmul %27, %28, %cst_12 {dimension_numbers = #tpu.dot_dimension_numbers<[1], [0], [0], [1], [0, 0, 1, 1], [], []>} : vector<16x128xf32>, vector<128x128xf32>, vector<16x128xf32> -> vector<16x128xf32>
    %c0_13 = arith.constant 0 : index
    %c0_14 = arith.constant 0 : index
    %30 = vector.load %arg5[%c0_13, %c0_14] : memref<1x128xf32, #tpu.memory_space<vmem>>, vector<1x128xf32>
    %31 = vector.broadcast %30 : vector<1x128xf32> to vector<16x128xf32>
    %32 = arith.addf %29, %31 : vector<16x128xf32>
    %cst_15 = arith.constant 5.000000e-01 : f32
    %33 = vector.broadcast %cst_15 : f32 to vector<16x128xf32>
    %34 = arith.mulf %33, %32 : vector<16x128xf32>
    %cst_16 = arith.constant 0.707106769 : f32
    %35 = vector.broadcast %cst_16 : f32 to vector<16x128xf32>
    %36 = arith.mulf %32, %35 : vector<16x128xf32>
    %37 = math.erf %36 : vector<16x128xf32>
    %cst_17 = arith.constant 1.000000e+00 : f32
    %38 = vector.broadcast %cst_17 : f32 to vector<16x128xf32>
    %39 = arith.addf %38, %37 : vector<16x128xf32>
    %40 = arith.mulf %34, %39 : vector<16x128xf32>
    %c0_18 = arith.constant 0 : index
    %c0_19 = arith.constant 0 : index
    %41 = vector.load %arg6[%c0_18, %c0_19] : memref<128x128xf32, #tpu.memory_space<vmem>>, vector<128x128xf32>
    %cst_20 = arith.constant dense<0.000000e+00> : vector<16x128xf32>
    %42 = tpu.matmul %40, %41, %cst_20 {dimension_numbers = #tpu.dot_dimension_numbers<[1], [0], [0], [1], [0, 0, 1, 1], [], []>} : vector<16x128xf32>, vector<128x128xf32>, vector<16x128xf32> -> vector<16x128xf32>
    %43 = arith.addf %0, %42 : vector<16x128xf32>
    %c0_21 = arith.constant 0 : index
    %c0_22 = arith.constant 0 : index
    %44 = vector.load %arg7[%c0_21, %c0_22] : memref<16x128xf32, #tpu.memory_space<vmem>>, vector<16x128xf32>
    tpu.vector_store %arg7[%c0_21, %c0_22], %43 {strides = array<i32>} : memref<16x128xf32, #tpu.memory_space<vmem>>, vector<16x128xf32>,
    return
  }
  func.func @transform_0(%arg0: i32) -> (i32, i32) {
    %c0_i32 = arith.constant 0 : i32
    %c0_i32_0 = arith.constant 0 : i32
    return %arg0, %c0_i32 : i32, i32
  }
  func.func @transform_1(%arg0: i32) -> (i32, i32) {
    %c0_i32 = arith.constant 0 : i32
    %c0_i32_0 = arith.constant 0 : i32
    %c0_i32_1 = arith.constant 0 : i32
    return %c0_i32, %c0_i32_0 : i32, i32
  }
  func.func @transform_2(%arg0: i32) -> (i32, i32) {
    %c0_i32 = arith.constant 0 : i32
    %c0_i32_0 = arith.constant 0 : i32
    %c0_i32_1 = arith.constant 0 : i32
    return %c0_i32, %c0_i32_0 : i32, i32
  }
  func.func @transform_3(%arg0: i32) -> (i32, i32) {
    %c0_i32 = arith.constant 0 : i32
    %c0_i32_0 = arith.constant 0 : i32
    %c0_i32_1 = arith.constant 0 : i32
    return %c0_i32, %c0_i32_0 : i32, i32
  }
  func.func @transform_4(%arg0: i32) -> (i32, i32) {
    %c0_i32 = arith.constant 0 : i32
    %c0_i32_0 = arith.constant 0 : i32
    %c0_i32_1 = arith.constant 0 : i32
    return %c0_i32, %c0_i32_0 : i32, i32
  }
  func.func @transform_5(%arg0: i32) -> (i32, i32) {
    %c0_i32 = arith.constant 0 : i32
    %c0_i32_0 = arith.constant 0 : i32
    %c0_i32_1 = arith.constant 0 : i32
    return %c0_i32, %c0_i32_0 : i32, i32
  }
  func.func @transform_6(%arg0: i32) -> (i32, i32) {
    %c0_i32 = arith.constant 0 : i32
    %c0_i32_0 = arith.constant 0 : i32
    return %arg0, %c0_i32 : i32, i32
  }
}

</mosaic_0001>

<llo_original>
// kernel: tpu_custom_call.1
$region0: #{tpu_custom_call.1}
  #allocation0 [shape = 'u32[]', space=smem, size = 0x4, offset = 0x4, fixed_abs, tag = 'smem constant byte address 0x4 - core index']
  #allocation1 [shape = 'u32[144,128]{1,0:T(1,128)}', space=vmem, size = 0x12000, scoped, tag = 'internal scratch']
  %s0 = inlined_call_operand.hbm [shape: f32[16,128], index: 0, kind: input, shape index: {}]
  %s1 = inlined_call_operand.vmem [shape: f32[1,128], index: 1, kind: input, shape index: {}]
  %s2 = inlined_call_operand.vmem [shape: f32[1,128], index: 2, kind: input, shape index: {}]
  %s3 = inlined_call_operand.hbm [shape: f32[128,128], index: 3, kind: input, shape index: {}]
  %s4 = inlined_call_operand.vmem [shape: f32[1,128], index: 4, kind: input, shape index: {}]
  %s5 = inlined_call_operand.hbm [shape: f32[128,128], index: 5, kind: input, shape index: {}]
  %s6 = inlined_call_operand.hbm [shape: f32[16,128], index: 6, kind: output, shape index: {}]
  %s7 = sld [smem:[#allocation0]]
  $region46: #{tpu_custom_call.1} parent=0
    _
  %s9 = ssub.s32 1, %s7
  %s10 = scalar_select 0, %s9, %s7
  $region1: #{tpu_custom_call.1} parent=0
    #allocation2 [shape = 'u8[8192]{0}', space=vmem, size = 0x2000, scoped, tag = 'input window, operand 0, single buffered']
    #allocation3 [shape = 's32[1]{0}', space=sflag, size = 0x4, scoped, tag = 'scoped memory for tpu_custom_call.1']
    #allocation4 [shape = 's32[1]{0}', space=sflag, size = 0x4, scoped, tag = 'scoped memory for tpu_custom_call.1']
    #allocation5 [shape = 'u8[65536]{0}', space=vmem, size = 0x10000, scoped, tag = 'input window, operand 3, single buffered']
    #allocation6 [shape = 's32[1]{0}', space=sflag, size = 0x4, scoped, tag = 'scoped memory for tpu_custom_call.1']
    #allocation7 [shape = 'u8[65536]{0}', space=vmem, size = 0x10000, scoped, tag = 'input window, operand 5, single buffered']
    #allocation8 [shape = 'u8[8192]{0}', space=vmem, size = 0x2000, scoped, tag = 'output window, operand 0, single buffered']
    %11 = vsyncpa [#allocation3], 0
    %12 = vsyncpa [#allocation6], 0
    %13 = vsyncpa [#allocation4], 0
    // Predicated region
    $region2: #{tpu_custom_call.1} parent=1 // pred_check
      _
    $region3: #{tpu_custom_call.1} parent=1 // pred_check_branch
      %15 = sbr.rel (0) target = $region5
    $region4: #{tpu_custom_call.1} parent=1 // pred_region
      %s17 = ssub.s32 256, 256
      %18 = vsyncadd [#allocation3], %s17
      %s19 = sshll.u32 [#allocation2], 4
      %s20 = int_to_ptr.vmem [resolvable:$true] %s19
      %25 = dma.hbm_to_vmem [thread:$0]  %s0, 256, %s20, [#allocation3], 128, 128, 8
    $region5: #{tpu_custom_call.1} parent=1 // pred_fallthru
      _
    // Predicated region
    $region6: #{tpu_custom_call.1} parent=1 // pred_check
      _
    $region7: #{tpu_custom_call.1} parent=1 // pred_check_branch
      %27 = sbr.rel (0) target = $region9
    $region8: #{tpu_custom_call.1} parent=1 // pred_region
      _
    $region9: #{tpu_custom_call.1} parent=1 // pred_fallthru
      _
    // Predicated region
    $region10: #{tpu_custom_call.1} parent=1 // pred_check
      _
    $region11: #{tpu_custom_call.1} parent=1 // pred_check_branch
      %29 = sbr.rel (0) target = $region13
    $region12: #{tpu_custom_call.1} parent=1 // pred_region
      _
    $region13: #{tpu_custom_call.1} parent=1 // pred_fallthru
      _
    // Predicated region
    $region14: #{tpu_custom_call.1} parent=1 // pred_check
      _
    $region15: #{tpu_custom_call.1} parent=1 // pred_check_branch
      %31 = sbr.rel (0) target = $region17
    $region16: #{tpu_custom_call.1} parent=1 // pred_region
      %s33 = ssub.s32 2048, 2048
      %34 = vsyncadd [#allocation6], %s33
      %s35 = sshll.u32 [#allocation5], 4
      %s36 = int_to_ptr.vmem [resolvable:$true] %s35
      %41 = dma.hbm_to_vmem [thread:$0]  %s3, 2048, %s36, [#allocation6], 128, 128, 8
    $region17: #{tpu_custom_call.1} parent=1 // pred_fallthru
      _
    // Predicated region
    $region18: #{tpu_custom_call.1} parent=1 // pred_check
      _
    $region19: #{tpu_custom_call.1} parent=1 // pred_check_branch
      %43 = sbr.rel (0) target = $region21
    $region20: #{tpu_custom_call.1} parent=1 // pred_region
      _
    $region21: #{tpu_custom_call.1} parent=1 // pred_fallthru
      _
    // Predicated region
    $region22: #{tpu_custom_call.1} parent=1 // pred_check
      _
    $region23: #{tpu_custom_call.1} parent=1 // pred_check_branch
      %45 = sbr.rel (0) target = $region25
    $region24: #{tpu_custom_call.1} parent=1 // pred_region
      %s47 = ssub.s32 2048, 2048
      %48 = vsyncadd [#allocation6], %s47
      %s49 = sshll.u32 [#allocation7], 4
      %s50 = int_to_ptr.vmem [resolvable:$true] %s49
      %55 = dma.hbm_to_vmem [thread:$0]  %s5, 2048, %s50, [#allocation6], 128, 128, 8
    $region25: #{tpu_custom_call.1} parent=1 // pred_fallthru
      _
    // Predicated region
    $region26: #{tpu_custom_call.1} parent=1 // pred_check
      _
    $region27: #{tpu_custom_call.1} parent=1 // pred_check_branch
      %57 = sbr.rel (0) target = $region29
    $region28: #{tpu_custom_call.1} parent=1 // pred_region
      %58 = dma.done [#allocation3], 256
    $region29: #{tpu_custom_call.1} parent=1 // pred_fallthru
      _
    // Predicated region
    $region30: #{tpu_custom_call.1} parent=1 // pred_check
      _
    $region31: #{tpu_custom_call.1} parent=1 // pred_check_branch
      %60 = sbr.rel (0) target = $region33
    $region32: #{tpu_custom_call.1} parent=1 // pred_region
      %61 = dma.done [#allocation6], 2048
    $region33: #{tpu_custom_call.1} parent=1 // pred_fallthru
      _
    // Predicated region
    $region34: #{tpu_custom_call.1} parent=1 // pred_check
      _
    $region35: #{tpu_custom_call.1} parent=1 // pred_check_branch
      %63 = sbr.rel (0) target = $region37
    $region36: #{tpu_custom_call.1} parent=1 // pred_region
      %64 = dma.done [#allocation6], 2048
    $region37: #{tpu_custom_call.1} parent=1 // pred_fallthru
      _
    %v65 = vld [vmem:[#allocation2] sm:$0xff]
    %v66 = vld [vmem:[#allocation2 + $0x8] sm:$0xff]
    %v67 = vld [vmem:[%s1] sm:$0x1]
    %v68 = vld [vmem:[%s2] sm:$0x1]
    %69 = vadd.xlane.f32.xlu0 %v65
    %v70 = vpop.xlane.xlu0 %69
    %71 = vadd.xlane.f32.xlu0 %v66
    %v72 = vpop.xlane.xlu0 %71
    %v73 = vmul.f32 %v70, 0.03125
    %v74 = vmul.f32 %v72, 0.03125
    %v75 = vsub.f32 %v65, %v73
    %v76 = vsub.f32 %v66, %v74
    %v77 = vlaneseq
    %v78 = vand.u32 %v77, 127
    %vm79 = vcmp.lt.s32.totalorder %v78, 32
    %v80 = vsel %vm79, %v75, 0.0
    %v81 = vsel %vm79, %v76, 0.0
    %v82 = vmul.f32 %v80, %v80
    %v83 = vmul.f32 %v81, %v81
    %84 = vadd.xlane.f32.xlu0 %v82
    %v85 = vpop.xlane.xlu0 %84
    %86 = vadd.xlane.f32.xlu0 %v83
    %v87 = vpop.xlane.xlu0 %86
    %v88 = vmul.f32 %v85, 0.03125
    %v89 = vmul.f32 %v87, 0.03125
    %v90 = vadd.f32 %v88, 1e-05
    %v91 = vadd.f32 %v89, 1e-05
    %v92 = vrsqrt.pop %v90
    %v93 = vrsqrt.pop %v91
    %v94 = vmul.f32 %v80, %v92
    %v95 = vmul.f32 %v81, %v93
    %v97 = vlaneseq
    %v98 = vshrl.u32 %v97, 7
    %v99 = vsub.s32 0, %v98
    %v100 = vrot.slane %v67, %v99
    %v102 = vmul.f32 %v94, %v100
    %v103 = vmul.f32 %v95, %v100
    %v105 = vlaneseq
    %v106 = vshrl.u32 %v105, 7
    %v107 = vsub.s32 0, %v106
    %v108 = vrot.slane %v68, %v107
    %v110 = vadd.f32 %v102, %v108
    %v111 = vadd.f32 %v103, %v108
    %v112 = vld [vmem:[#allocation5] sm:$0xff]
    %v113 = vld [vmem:[#allocation5 + $0x8] sm:$0xff]
    %v114 = vld [vmem:[#allocation5 + $0x10] sm:$0xff]
    %v115 = vld [vmem:[#allocation5 + $0x18] sm:$0xff]
    %v116 = vld [vmem:[#allocation5 + $0x20] sm:$0xff]
    %v117 = vld [vmem:[#allocation5 + $0x28] sm:$0xff]
    %v118 = vld [vmem:[#allocation5 + $0x30] sm:$0xff]
    %v119 = vld [vmem:[#allocation5 + $0x38] sm:$0xff]
    %v120 = vld [vmem:[#allocation5 + $0x40] sm:$0xff]
    %v121 = vld [vmem:[#allocation5 + $0x48] sm:$0xff]
    %v122 = vld [vmem:[#allocation5 + $0x50] sm:$0xff]
    %v123 = vld [vmem:[#allocation5 + $0x58] sm:$0xff]
    %v124 = vld [vmem:[#allocation5 + $0x60] sm:$0xff]
    %v125 = vld [vmem:[#allocation5 + $0x68] sm:$0xff]
    %v126 = vld [vmem:[#allocation5 + $0x70] sm:$0xff]
    %v127 = vld [vmem:[#allocation5 + $0x78] sm:$0xff]
    %v128 = vld [vmem:[%s4] sm:$0x1]
    %v130 = vlaneseq
    %v131 = vshrl.u32 %v130, 7
    %v132 = vsub.s32 0, %v131
    %v133 = vrot.slane %v128, %v132
    %135 = vmatprep.subr.mxu0 0.0
    %136 = vmatpush1.msra.mxu0 %v112
    %137 = vmatprep.subr.mxu0 0.0
    %138 = vmatpush1.msra.mxu0 %v113
    %139 = vmatprep.subr.mxu0 0.0
    %140 = vmatpush1.msra.mxu0 %v114
    %141 = vmatprep.subr.mxu0 0.0
    %142 = vmatpush1.msra.mxu0 %v115
    %143 = vmatprep.subr.mxu0 0.0
    %144 = vmatpush1.msra.mxu0 %v116
    %145 = vmatprep.subr.mxu0 0.0
    %146 = vmatpush1.msra.mxu0 %v117
    %147 = vmatprep.subr.mxu0 0.0
    %148 = vmatpush1.msra.mxu0 %v118
    %149 = vmatprep.subr.mxu0 0.0
    %150 = vmatpush1.msra.mxu0 %v119
    %151 = vmatprep.subr.mxu0 0.0
    %152 = vmatpush1.msra.mxu0 %v120
    %153 = vmatprep.subr.mxu0 0.0
    %154 = vmatpush1.msra.mxu0 %v121
    %155 = vmatprep.subr.mxu0 0.0
    %156 = vmatpush1.msra.mxu0 %v122
    %157 = vmatprep.subr.mxu0 0.0
    %158 = vmatpush1.msra.mxu0 %v123
    %159 = vmatprep.subr.mxu0 0.0
    %160 = vmatpush1.msra.mxu0 %v124
    %161 = vmatprep.subr.mxu0 0.0
    %162 = vmatpush1.msra.mxu0 %v125
    %163 = vmatprep.subr.mxu0 0.0
    %164 = vmatpush1.msra.mxu0 %v126
    %165 = vmatprep.subr.mxu0 0.0
    %166 = vmatpush1.msra.mxu0 %v127
    %167 = vmatprep.subr.mxu0 0.0
    %168 = vmatpush1.msra.mxu0 0.0
    %169 = vmatprep.subr.mxu0 0.0
    %170 = vmatpush1.msra.mxu0 0.0
    %171 = vmatprep.subr.mxu0 0.0
    %172 = vmatpush1.msra.mxu0 0.0
    %173 = vmatprep.subr.mxu0 0.0
    %174 = vmatpush1.msra.mxu0 0.0
    %175 = vmatprep.subr.mxu0 0.0
    %176 = vmatpush1.msra.mxu0 0.0
    %177 = vmatprep.subr.mxu0 0.0
    %178 = vmatpush1.msra.mxu0 0.0
    %179 = vmatprep.subr.mxu0 0.0
    %180 = vmatpush1.msra.mxu0 0.0
    %181 = vmatprep.subr.mxu0 0.0
    %182 = vmatpush1.msra.mxu0 0.0
    %183 = vmatprep.subr.mxu0 0.0
    %184 = vmatpush1.msra.mxu0 0.0
    %185 = vmatprep.subr.mxu0 0.0
    %186 = vmatpush1.msra.mxu0 0.0
    %187 = vmatprep.subr.mxu0 0.0
    %188 = vmatpush1.msra.mxu0 0.0
    %189 = vmatprep.subr.mxu0 0.0
    %190 = vmatpush1.msra.mxu0 0.0
    %191 = vmatprep.subr.mxu0 0.0
    %192 = vmatpush1.msra.mxu0 0.0
    %193 = vmatprep.subr.mxu0 0.0
    %194 = vmatpush1.msra.mxu0 0.0
    %195 = vmatprep.subr.mxu0 0.0
    %196 = vmatpush1.msra.mxu0 0.0
    %197 = vmatprep.subr.mxu0 0.0
    %198 = vmatpush1.msra.mxu0 0.0
    %199 = vmatprep.mubr.f32.mxu0 0.0
    %200 = vmatmul.mubr.f32.gmra.mrb[0].mxu0 %v110
    %v201 = vpop.f32.mrb[0].mxu0
    %v202 = vadd.f32 %v133, %v201
    %v203 = vpop.f32.mrb[0].mxu0
    %204 = vmatprep.mubr.f32.mxu0 0.0
    %205 = vmatmul.mubr.f32.gmra.mrb[0].mxu0 %v111
    %v206 = vpop.f32.mrb[0].mxu0
    %v207 = vadd.f32 %v133, %v206
    %v208 = vpop.f32.mrb[0].mxu0
    %209 = vdwg.mxu0
    %v210 = vmul.f32 %v202, 0.5
    %v211 = vmul.f32 %v207, 0.5
    %v212 = vmul.f32 %v202, 0.70710677
    %v213 = vmul.f32 %v207, 0.70710677
    %v214 = verf.f32.pop %v212
    %v215 = verf.f32.pop %v213
    %v216 = vadd.f32 %v214, 1.0
    %v217 = vadd.f32 %v215, 1.0
    %v218 = vmul.f32 %v210, %v216
    %v219 = vmul.f32 %v211, %v217
    %v220 = vld [vmem:[#allocation7] sm:$0xff]
    %v221 = vld [vmem:[#allocation7 + $0x8] sm:$0xff]
    %v222 = vld [vmem:[#allocation7 + $0x10] sm:$0xff]
    %v223 = vld [vmem:[#allocation7 + $0x18] sm:$0xff]
    %v224 = vld [vmem:[#allocation7 + $0x20] sm:$0xff]
    %v225 = vld [vmem:[#allocation7 + $0x28] sm:$0xff]
    %v226 = vld [vmem:[#allocation7 + $0x30] sm:$0xff]
    %v227 = vld [vmem:[#allocation7 + $0x38] sm:$0xff]
    %v228 = vld [vmem:[#allocation7 + $0x40] sm:$0xff]
    %v229 = vld [vmem:[#allocation7 + $0x48] sm:$0xff]
    %v230 = vld [vmem:[#allocation7 + $0x50] sm:$0xff]
    %v231 = vld [vmem:[#allocation7 + $0x58] sm:$0xff]
    %v232 = vld [vmem:[#allocation7 + $0x60] sm:$0xff]
    %v233 = vld [vmem:[#allocation7 + $0x68] sm:$0xff]
    %v234 = vld [vmem:[#allocation7 + $0x70] sm:$0xff]
    %v235 = vld [vmem:[#allocation7 + $0x78] sm:$0xff]
    %236 = vmatprep.subr.mxu0 0.0
    %237 = vmatpush1.msra.mxu0 %v220
    %238 = vmatprep.subr.mxu0 0.0
    %239 = vmatpush1.msra.mxu0 %v221
    %240 = vmatprep.subr.mxu0 0.0
    %241 = vmatpush1.msra.mxu0 %v222
    %242 = vmatprep.subr.mxu0 0.0
    %243 = vmatpush1.msra.mxu0 %v223
    %244 = vmatprep.subr.mxu0 0.0
    %245 = vmatpush1.msra.mxu0 %v224
    %246 = vmatprep.subr.mxu0 0.0
    %247 = vmatpush1.msra.mxu0 %v225
    %248 = vmatprep.subr.mxu0 0.0
    %249 = vmatpush1.msra.mxu0 %v226
    %250 = vmatprep.subr.mxu0 0.0
    %251 = vmatpush1.msra.mxu0 %v227
    %252 = vmatprep.subr.mxu0 0.0
    %253 = vmatpush1.msra.mxu0 %v228
    %254 = vmatprep.subr.mxu0 0.0
    %255 = vmatpush1.msra.mxu0 %v229
    %256 = vmatprep.subr.mxu0 0.0
    %257 = vmatpush1.msra.mxu0 %v230
    %258 = vmatprep.subr.mxu0 0.0
    %259 = vmatpush1.msra.mxu0 %v231
    %260 = vmatprep.subr.mxu0 0.0
    %261 = vmatpush1.msra.mxu0 %v232
    %262 = vmatprep.subr.mxu0 0.0
    %263 = vmatpush1.msra.mxu0 %v233
    %264 = vmatprep.subr.mxu0 0.0
    %265 = vmatpush1.msra.mxu0 %v234
    %266 = vmatprep.subr.mxu0 0.0
    %267 = vmatpush1.msra.mxu0 %v235
    %268 = vmatprep.subr.mxu0 0.0
    %269 = vmatpush1.msra.mxu0 0.0
    %270 = vmatprep.subr.mxu0 0.0
    %271 = vmatpush1.msra.mxu0 0.0
    %272 = vmatprep.subr.mxu0 0.0
    %273 = vmatpush1.msra.mxu0 0.0
    %274 = vmatprep.subr.mxu0 0.0
    %275 = vmatpush1.msra.mxu0 0.0
    %276 = vmatprep.subr.mxu0 0.0
    %277 = vmatpush1.msra.mxu0 0.0
    %278 = vmatprep.subr.mxu0 0.0
    %279 = vmatpush1.msra.mxu0 0.0
    %280 = vmatprep.subr.mxu0 0.0
    %281 = vmatpush1.msra.mxu0 0.0
    %282 = vmatprep.subr.mxu0 0.0
    %283 = vmatpush1.msra.mxu0 0.0
    %284 = vmatprep.subr.mxu0 0.0
    %285 = vmatpush1.msra.mxu0 0.0
    %286 = vmatprep.subr.mxu0 0.0
    %287 = vmatpush1.msra.mxu0 0.0
    %288 = vmatprep.subr.mxu0 0.0
    %289 = vmatpush1.msra.mxu0 0.0
    %290 = vmatprep.subr.mxu0 0.0
    %291 = vmatpush1.msra.mxu0 0.0
    %292 = vmatprep.subr.mxu0 0.0
    %293 = vmatpush1.msra.mxu0 0.0
    %294 = vmatprep.subr.mxu0 0.0
    %295 = vmatpush1.msra.mxu0 0.0
    %296 = vmatprep.subr.mxu0 0.0
    %297 = vmatpush1.msra.mxu0 0.0
    %298 = vmatprep.subr.mxu0 0.0
    %299 = vmatpush1.msra.mxu0 0.0
    %300 = vmatprep.mubr.f32.mxu0 0.0
    %301 = vmatmul.mubr.f32.gmra.mrb[0].mxu0 %v218
    %v302 = vpop.f32.mrb[0].mxu0
    %v303 = vadd.f32 0.0, %v302
    %v304 = vpop.f32.mrb[0].mxu0
    %305 = vmatprep.mubr.f32.mxu0 0.0
    %306 = vmatmul.mubr.f32.gmra.mrb[0].mxu0 %v219
    %v307 = vpop.f32.mrb[0].mxu0
    %v308 = vadd.f32 0.0, %v307
    %v309 = vpop.f32.mrb[0].mxu0
    %310 = vdwg.mxu0
    %v311 = vadd.f32 %v65, %v303
    %v312 = vadd.f32 %v66, %v308
    %313 = vst [vmem:[#allocation8] sm:$0xff] %v311
    %314 = vst [vmem:[#allocation8 + $0x8] sm:$0xff] %v312
    // Predicated region
    $region38: #{tpu_custom_call.1} parent=1 // pred_check
      _
    $region39: #{tpu_custom_call.1} parent=1 // pred_check_branch
      %316 = sbr.rel (0) target = $region41
    $region40: #{tpu_custom_call.1} parent=1 // pred_region
      %s318 = ssub.s32 256, 256
      %319 = vsyncadd [#allocation4], %s318
      %s320 = sshll.u32 [#allocation8], 4
      %s321 = int_to_ptr.vmem [resolvable:$true] %s320
      %326 = dma.vmem_to_hbm [thread:$0]  %s321, 256, %s6, [#allocation4], 128, 128, 8
    $region41: #{tpu_custom_call.1} parent=1 // pred_fallthru
      _
    // Predicated region
    $region42: #{tpu_custom_call.1} parent=1 // pred_check
      _
    $region43: #{tpu_custom_call.1} parent=1 // pred_check_branch
      %328 = sbr.rel (0) target = $region45
    $region44: #{tpu_custom_call.1} parent=1 // pred_region
      %329 = dma.done [#allocation4], 256
    $region45: #{tpu_custom_call.1} parent=1 // pred_fallthru
      _
    %330 = vsyncpa [#allocation3], 1
    %331 = vsyncpa [#allocation6], 1
    %332 = vsyncpa [#allocation4], 1

</llo_original>
